<compile_context>
chip_gen: v6e
topology: v6e:2x2x1
jax: 0.10.0
libtpu: 0.0.40
codegen_flags: <defaults>
</compile_context>

<pallas_src>
import functools

import jax
import jax.numpy as jnp
from jax.experimental import pallas as pl
from jax.experimental.pallas import tpu as pltpu


def _clayernorm_kernel(x_ref, wb_ref, o_ref, *, eps, inv_c):
    # x_ref block: (1, C, TL); wb_ref: (2, C, 1) f32  [0]=weight, [1]=bias
    x = x_ref[...].astype(jnp.float32)                       # (1, C, TL)

    # Two-pass moments over the channel (sublane) axis; population variance,
    # exactly as nn.LayerNorm computes it.
    mean = jnp.sum(x, axis=1, keepdims=True) * inv_c          # (1, 1, TL)
    xc = x - mean                                             # (1, C, TL)
    var = jnp.sum(xc * xc, axis=1, keepdims=True) * inv_c     # (1, 1, TL)
    inv = jax.lax.rsqrt(var + eps)                            # EUP slot

    # Factored affine: no full-size (C, TL) scale/shift intermediates.
    xn = xc * inv                                             # (1,1,TL) bcast over sublanes
    w = wb_ref[0][None]                                       # (1, C, 1) f32
    b = wb_ref[1][None]                                       # (1, C, 1) f32
    o_ref[...] = (xn * w + b).astype(o_ref.dtype)             # (1,C,1) bcast over lanes


def _choose_tile_l(C, L, B, itemsize):
    """Lane-tile width: multiple of 128, capped at 512; cdiv grid handles remainders."""
    if L <= 256:
        # A single full-extent lane block is always a legal block shape and
        # covers short / ragged L without any padding machinery.
        return L
    # Keep double-buffered in/out blocks + in-kernel f32 temporaries inside a
    # conservative budget that fits v5e's 16 MiB scoped default and v7x's
    # 64 MiB physical VMEM (vmem_limit_bytes is also set explicitly below).
    budget = 10 * 1024 * 1024
    per_col = C * (2 * 2 * itemsize + 4 * 4)   # dbuf in+out (x dtype) + ~4 f32 temps
    max_cols = budget // max(per_col, 1)
    tl = max(128, min(512, (max_cols // 128) * 128))
    # Never exceed the largest 128-multiple <= L (block no wider than the array).
    tl = min(tl, (L // 128) * 128)
    # Give v7x's second TensorCore work when B == 1: force >= 2 lane tiles.
    if B == 1:
        tl = min(tl, max(128, ((L - 1) // 128) * 128))
    return tl


def clayernorm(x, weight, bias, eps=1e-5):
    """Channel-wise LayerNorm. x: [B, C, L]; weight, bias: [C]."""
    assert x.ndim == 3, "CLayerNorm only accepts 3-D tensors"
    B, C, L = x.shape

    # Pack weight and bias into a single (2, C, 1) float32 operand (kept in f32
    # so low-precision inputs do not quantize the affine parameters).
    wb = jnp.stack(
        [jnp.asarray(weight, jnp.float32).reshape(C, 1),
         jnp.asarray(bias, jnp.float32).reshape(C, 1)],
        axis=0,
    )

    tl = _choose_tile_l(C, L, B, x.dtype.itemsize)
    grid = (B, pl.cdiv(L, tl))

    grid_spec = pltpu.PrefetchScalarGridSpec(
        num_scalar_prefetch=0,
        grid=grid,
        in_specs=[
            pl.BlockSpec((1, C, tl), lambda b, l: (b, 0, l)),
            pl.BlockSpec((2, C, 1), lambda b, l: (0, 0, 0)),
        ],
        out_specs=pl.BlockSpec((1, C, tl), lambda b, l: (b, 0, l)),
    )

    itemsize = x.dtype.itemsize
    cost = pl.CostEstimate(
        flops=7 * B * C * L,
        transcendentals=B * L,
        bytes_accessed=2 * B * C * L * itemsize + wb.size * 4,
    )

    return pl.pallas_call(
        functools.partial(_clayernorm_kernel, eps=float(eps), inv_c=1.0 / C),
        out_shape=jax.ShapeDtypeStruct((B, C, L), x.dtype),
        grid_spec=grid_spec,
        compiler_params=pltpu.CompilerParams(
            dimension_semantics=("parallel", "parallel"),
            vmem_limit_bytes=32 * 1024 * 1024,
        ),
        cost_estimate=cost,
    )(x, wb)


def _reference(x, weight, bias, eps=1e-5):
    # Pure-JAX reference mirroring the PyTorch forward exactly.
    xt = jnp.transpose(x, (0, 2, 1))                       # [B, L, C]
    mean = jnp.mean(xt, axis=-1, keepdims=True)
    var = jnp.mean((xt - mean) ** 2, axis=-1, keepdims=True)
    yn = (xt - mean) / jnp.sqrt(var + eps)
    yn = yn * weight + bias
    return jnp.transpose(yn, (0, 2, 1))                    # [B, C, L]


if __name__ == "__main__":
    key = jax.random.PRNGKey(0)

    # Case 1: small shape implied by the module (L <= 256 -> full-extent block).
    # Case 2: L a multiple of 128 (single 256-wide lane block), C not mult of 8.
    # Case 3: B == 1, L = 640 -> TL = 512, cdiv grid with a masked partial tile
    #         and >= 2 grid points for the second TensorCore.
    # Case 4: ragged L (not a multiple of 128, > 256) -> TL = 384, partial tile.
    cases = [
        (2, 4, 16),
        (2, 6, 256),
        (1, 8, 640),
        (2, 5, 461),
    ]

    for B, C, L in cases:
        key, kx, kw, kb = jax.random.split(key, 4)
        x = jax.random.normal(kx, (B, C, L), dtype=jnp.float32)
        # nn.LayerNorm defaults are weight=1, bias=0; use random affine params
        # to exercise the full path (deterministic via PRNGKey(0)).
        weight = 1.0 + 0.1 * jax.random.normal(kw, (C,), dtype=jnp.float32)
        bias = 0.1 * jax.random.normal(kb, (C,), dtype=jnp.float32)

        out = clayernorm(x, weight, bias, eps=1e-5)
        out = jax.block_until_ready(out)

        ref = _reference(x, weight, bias, eps=1e-5)
        assert out.shape == (B, C, L)
        assert jnp.allclose(out, ref, atol=1e-5, rtol=1e-5), (
            f"mismatch vs reference for shape {(B, C, L)}")

    print("KERNEL_OK")
</pallas_src>

<mosaic_0001>
module attributes {stable_mosaic.version = 11 : i64} {
  func.func @_clayernorm_kernel(%arg0: i32, %arg1: i32, %arg2: memref<1x4x16xf32, #tpu.memory_space<vmem>>, %arg3: memref<2x4x1xf32, #tpu.memory_space<vmem>>, %arg4: memref<1x4x16xf32, #tpu.memory_space<vmem>>) attributes {dimension_semantics = [#tpu.dimension_semantics<parallel>, #tpu.dimension_semantics<parallel>], iteration_bounds = array<i64: 2, 1>, scalar_prefetch = 0 : i64, scratch_operands = 0 : i64, tpu.core_type = #tpu.core_type<tc>, window_params = [{transform_indices = @transform_0, window_bounds = array<i64: 1, 4, 16>}, {pipeline_mode = #tpu.pipeline_mode<synchronous>, transform_indices = @transform_1, window_bounds = array<i64: 2, 4, 1>}, {transform_indices = @transform_2, window_bounds = array<i64: 1, 4, 16>}]} {
    %c0 = arith.constant 0 : index
    %c0_0 = arith.constant 0 : index
    %c0_1 = arith.constant 0 : index
    %0 = vector.load %arg2[%c0, %c0_0, %c0_1] : memref<1x4x16xf32, #tpu.memory_space<vmem>>, vector<1x4x16xf32>
    %cst = arith.constant dense<0.000000e+00> : vector<1x16xf32>
    %1 = vector.multi_reduction <add>, %0, %cst [1] : vector<1x4x16xf32> to vector<1x16xf32>
    %2 = vector.shape_cast %1 : vector<1x16xf32> to vector<1x1x16xf32>
    %cst_2 = arith.constant 2.500000e-01 : f32
    %3 = vector.broadcast %cst_2 : f32 to vector<1x1x16xf32>
    %4 = arith.mulf %2, %3 : vector<1x1x16xf32>
    %5 = vector.broadcast %4 : vector<1x1x16xf32> to vector<1x4x16xf32>
    %6 = arith.subf %0, %5 : vector<1x4x16xf32>
    %7 = arith.mulf %6, %6 : vector<1x4x16xf32>
    %cst_3 = arith.constant dense<0.000000e+00> : vector<1x16xf32>
    %8 = vector.multi_reduction <add>, %7, %cst_3 [1] : vector<1x4x16xf32> to vector<1x16xf32>
    %9 = vector.shape_cast %8 : vector<1x16xf32> to vector<1x1x16xf32>
    %cst_4 = arith.constant 2.500000e-01 : f32
    %10 = vector.broadcast %cst_4 : f32 to vector<1x1x16xf32>
    %11 = arith.mulf %9, %10 : vector<1x1x16xf32>
    %cst_5 = arith.constant 9.99999974E-6 : f32
    %12 = vector.broadcast %cst_5 : f32 to vector<1x1x16xf32>
    %13 = arith.addf %11, %12 : vector<1x1x16xf32>
    %14 = math.rsqrt %13 : vector<1x1x16xf32>
    %15 = vector.broadcast %14 : vector<1x1x16xf32> to vector<1x4x16xf32>
    %16 = arith.mulf %6, %15 : vector<1x4x16xf32>
    %c0_6 = arith.constant 0 : index
    %c0_7 = arith.constant 0 : index
    %c0_8 = arith.constant 0 : index
    %17 = vector.load %arg3[%c0_6, %c0_7, %c0_8] : memref<2x4x1xf32, #tpu.memory_space<vmem>>, vector<1x4x1xf32>
    %18 = vector.shape_cast %17 : vector<1x4x1xf32> to vector<4x1xf32>
    %19 = vector.shape_cast %18 : vector<4x1xf32> to vector<1x4x1xf32>
    %c1 = arith.constant 1 : index
    %c0_9 = arith.constant 0 : index
    %c0_10 = arith.constant 0 : index
    %20 = vector.load %arg3[%c1, %c0_9, %c0_10] : memref<2x4x1xf32, #tpu.memory_space<vmem>>, vector<1x4x1xf32>
    %21 = vector.shape_cast %20 : vector<1x4x1xf32> to vector<4x1xf32>
    %22 = vector.shape_cast %21 : vector<4x1xf32> to vector<1x4x1xf32>
    %23 = vector.broadcast %19 : vector<1x4x1xf32> to vector<1x4x16xf32>
    %24 = arith.mulf %16, %23 : vector<1x4x16xf32>
    %25 = vector.broadcast %22 : vector<1x4x1xf32> to vector<1x4x16xf32>
    %26 = arith.addf %24, %25 : vector<1x4x16xf32>
    %c0_11 = arith.constant 0 : index
    %c0_12 = arith.constant 0 : index
    %c0_13 = arith.constant 0 : index
    %27 = vector.load %arg4[%c0_11, %c0_12, %c0_13] : memref<1x4x16xf32, #tpu.memory_space<vmem>>, vector<1x4x16xf32>
    tpu.vector_store %arg4[%c0_11, %c0_12, %c0_13], %26 {strides = array<i32>} : memref<1x4x16xf32, #tpu.memory_space<vmem>>, vector<1x4x16xf32>,
    return
  }
  func.func @transform_0(%arg0: i32, %arg1: i32) -> (i32, i32, i32) {
    %c0_i32 = arith.constant 0 : i32
    %c0_i32_0 = arith.constant 0 : i32
    return %arg0, %c0_i32, %arg1 : i32, i32, i32
  }
  func.func @transform_1(%arg0: i32, %arg1: i32) -> (i32, i32, i32) {
    %c0_i32 = arith.constant 0 : i32
    %c0_i32_0 = arith.constant 0 : i32
    %c0_i32_1 = arith.constant 0 : i32
    %c0_i32_2 = arith.constant 0 : i32
    return %c0_i32, %c0_i32_0, %c0_i32_1 : i32, i32, i32
  }
  func.func @transform_2(%arg0: i32, %arg1: i32) -> (i32, i32, i32) {
    %c0_i32 = arith.constant 0 : i32
    %c0_i32_0 = arith.constant 0 : i32
    return %arg0, %c0_i32, %arg1 : i32, i32, i32
  }
}

</mosaic_0001>

<llo_original>
// kernel: tpu_custom_call.1
$region0: #{tpu_custom_call.1}
  #allocation0 [shape = 'u32[]', space=smem, size = 0x4, offset = 0x4, fixed_abs, tag = 'smem constant byte address 0x4 - core index']
  #allocation1 [shape = 'u32[144,128]{1,0:T(1,128)}', space=vmem, size = 0x12000, scoped, tag = 'internal scratch']
  %s0 = inlined_call_operand.vmem [shape: f32[2,4,16], index: 0, kind: input, shape index: {}]
  %s1 = inlined_call_operand.vmem [shape: f32[2,4,1], index: 1, kind: input, shape index: {}]
  %s2 = inlined_call_operand.hbm [shape: f32[2,4,16], index: 2, kind: output, shape index: {}]
  %s3 = sld [smem:[#allocation0]]
  $region41: #{tpu_custom_call.1} parent=0
    _
  %s5 = ssub.s32 1, %s3
  %s6 = scalar_select 0, %s5, %s3
  $region1: #{tpu_custom_call.1} parent=0
    #allocation2 [shape = 'u8[4096]{0}', space=vmem, size = 0x1000, scoped, tag = 'output window, operand 0']
    #allocation3 [shape = 's32[2]{0}', space=sflag, size = 0x8, scoped, tag = 'scoped memory for tpu_custom_call.1']
    %7 = vsyncpa [#allocation3], 0
    %s8 = scalar_lea.sflag [#allocation3], 1
    %9 = vsyncpa %s8, 0
    loop: start=0, step=1, limit=4
    $region2: #{tpu_custom_call.1} parent=1 // loop_pre_header
      _
    $region3: #{tpu_custom_call.1} parent=1 // loop_header
      %s11 = sphi 0, %s15
      %p12 = scmp.ge.s32.totalorder %s11, 4
      %s18 = sphi 0, %s30
      %s19 = sphi 0, %s26
      %s20 = sphi 0, %s18
      %s21 = sphi 0, %s19
      %s22 = sphi 0, %s20
      %s23 = sphi 0, %s21
      %s35 = sphi 0, %s37
      %s38 = sphi 0, %s35
      %s39 = sphi 0, %s38
      %s55 = sphi 0, %s39
      %s59 = sphi 0, %s59
      %s61 = sphi 0, %s59
      %s62 = sphi 0, %s61
      %s76 = sphi 0, %s62
      %s84 = sphi 0, %s86
      %s87 = sphi 0, %s84
      %s88 = sphi 0, %s87
      %s104 = sphi 0, %s88
    $region4: #{tpu_custom_call.1} parent=1 // loop_header_branch
      %14 = sbr.rel (%p12) target = $region8
    $region5: #{tpu_custom_call.1} parent=1 // loop_body
      %s16 = ssub.s32 %s11, 1
      %s17 = ssub.s32 %s11, 2
      %s24 = sadd.s32 1, %s19
      %p25 = scmp.ge.s32.totalorder %s24, 1
      %s26 = scalar_select %p25, 0, %s24
      %s27 = sadd.s32 1, %s18
      %s28 = scalar_select %p25, %s27, %s18
      %p29 = scmp.ge.s32.totalorder %s28, 2
      %s30 = scalar_select %p29, 0, %s28
      %s31 = ssub.s32 %s18, %s30
      %s32 = ssub.s32 %s19, %s26
      %s33 = sor.u32 %s31, %s32
      %p34 = scmp.eq.s32.totalorder %s33, 0
      %s36 = sadd.s32 %s35, 1
      %s37 = scalar_select %p34, %s35, %s36
      %p40 = pneg %p34
      %p41 = scmp.eq.s32.totalorder %s11, 1
      %p42 = por %p40, %p41
      %p43 = scmp.ne.s32.totalorder %s35, %s38
      %p44 = scmp.eq.s32.totalorder %s11, 0
      %p45 = por %p43, %p44
      %p46 = scmp.ne.s32.totalorder %s35, %s38
      %p47 = scmp.eq.s32.totalorder %s16, 1
      %p48 = por %p46, %p47
      %p49 = scmp.ne.s32.totalorder %s38, %s39
      %p50 = scmp.eq.s32.totalorder %s16, 0
      %p51 = por %p49, %p50
      %p52 = scmp.ne.s32.totalorder %s38, %s39
      %p53 = scmp.eq.s32.totalorder %s17, 1
      %p54 = por %p52, %p53
      %p56 = scmp.ne.s32.totalorder %s39, %s55
      %p57 = scmp.eq.s32.totalorder %s17, 0
      %p58 = por %p56, %p57
      %s60 = sadd.s32 %s59, 1
      %p63 = scmp.eq.s32.totalorder %s11, 1
      %p64 = scmp.ne.s32.totalorder %s59, %s61
      %p65 = scmp.eq.s32.totalorder %s11, 0
      %p66 = por %p64, %p65
      %p67 = scmp.ne.s32.totalorder %s59, %s61
      %p68 = scmp.eq.s32.totalorder %s16, 1
      %p69 = por %p67, %p68
      %p70 = scmp.ne.s32.totalorder %s61, %s62
      %p71 = scmp.eq.s32.totalorder %s16, 0
      %p72 = por %p70, %p71
      %p73 = scmp.ne.s32.totalorder %s61, %s62
      %p74 = scmp.eq.s32.totalorder %s17, 1
      %p75 = por %p73, %p74
      %p77 = scmp.ne.s32.totalorder %s62, %s76
      %p78 = scmp.eq.s32.totalorder %s17, 0
      %p79 = por %p77, %p78
      %s80 = ssub.s32 %s18, %s30
      %s81 = ssub.s32 %s19, %s26
      %s82 = sor.u32 %s80, %s81
      %p83 = scmp.eq.s32.totalorder %s82, 0
      %s85 = sadd.s32 %s84, 1
      %s86 = scalar_select %p83, %s84, %s85
      %p89 = pneg %p83
      %p90 = scmp.eq.s32.totalorder %s11, 1
      %p91 = por %p89, %p90
      %p92 = scmp.ne.s32.totalorder %s84, %s87
      %p93 = scmp.eq.s32.totalorder %s11, 0
      %p94 = por %p92, %p93
      %p95 = scmp.ne.s32.totalorder %s84, %s87
      %p96 = scmp.eq.s32.totalorder %s16, 1
      %p97 = por %p95, %p96
      %p98 = scmp.ne.s32.totalorder %s87, %s88
      %p99 = scmp.eq.s32.totalorder %s16, 0
      %p100 = por %p98, %p99
      %p101 = scmp.ne.s32.totalorder %s87, %s88
      %p102 = scmp.eq.s32.totalorder %s17, 1
      %p103 = por %p101, %p102
      %p105 = scmp.ne.s32.totalorder %s88, %s104
      %p106 = scmp.eq.s32.totalorder %s17, 0
      %p107 = por %p105, %p106
      %p108 = scmp.le.s32.totalorder 1, %s11
      %p109 = scmp.lt.s32.totalorder %s11, 3
      %p110 = pnand %p108, %p109
      %p111 = pneg %p110
      // Predicated region
      $region9: #{tpu_custom_call.1} parent=5 // pred_check
        _
      $region10: #{tpu_custom_call.1} parent=5 // pred_check_branch
        %113 = sbr.rel (%p110) target = $region12
      $region11: #{tpu_custom_call.1} parent=5 // pred_region
        %s114 = ssub.s32 %s11, 1
        // Predicated region
        $region13: #{tpu_custom_call.1} parent=11 // pred_check
          %p115 = pneg %p72
        $region14: #{tpu_custom_call.1} parent=11 // pred_check_branch
          %117 = sbr.rel (%p115) target = $region16
        $region15: #{tpu_custom_call.1} parent=11 // pred_region
          _
        $region16: #{tpu_custom_call.1} parent=11 // pred_fallthru
          _
      $region12: #{tpu_custom_call.1} parent=5 // pred_fallthru
        _
      %p118 = scmp.lt.s32.totalorder %s11, 2
      // Predicated region
      $region17: #{tpu_custom_call.1} parent=5 // pred_check
        %p119 = pneg %p118
      $region18: #{tpu_custom_call.1} parent=5 // pred_check_branch
        %121 = sbr.rel (%p119) target = $region20
      $region19: #{tpu_custom_call.1} parent=5 // pred_region
        // Predicated region
        $region21: #{tpu_custom_call.1} parent=19 // pred_check
          %p122 = pneg %p45
        $region22: #{tpu_custom_call.1} parent=19 // pred_check_branch
          %124 = sbr.rel (%p122) target = $region24
        $region23: #{tpu_custom_call.1} parent=19 // pred_region
          %p125 = scmp.lt.s32.totalorder %s18, 1
          %s126 = scalar_select %p125, %s18, 1
          %p127 = scmp.lt.s32.totalorder %s19, 0
          %s128 = scalar_select %p127, %s19, 0
          %s129 = sadd.s32 %s128, %s126
          %s130 = smul.addr %s129, 4
          %s131 = scalar_lea.vmem %s0, %s130
        $region24: #{tpu_custom_call.1} parent=19 // pred_fallthru
          _
      $region20: #{tpu_custom_call.1} parent=5 // pred_fallthru
        _
      %p132 = scmp.le.s32.totalorder 1, %s11
      %p133 = scmp.lt.s32.totalorder %s11, 3
      %p134 = pnand %p132, %p133
      %p135 = pneg %p134
      // Predicated region
      $region25: #{tpu_custom_call.1} parent=5 // pred_check
        _
      $region26: #{tpu_custom_call.1} parent=5 // pred_check_branch
        %137 = sbr.rel (%p134) target = $region28
      $region27: #{tpu_custom_call.1} parent=5 // pred_region
        %s138 = ssub.s32 %s11, 1
        %p139 = scmp.lt.s32.totalorder %s20, 1
        %s140 = scalar_select %p139, %s20, 1
        %p141 = scmp.lt.s32.totalorder %s21, 0
        %s142 = scalar_select %p141, %s21, 0
        %s143 = sadd.s32 %s142, %s140
        %s144 = smul.addr %s143, 4
        %s145 = scalar_lea.vmem %s0, %s144
        %p146 = pneg %p51
        %p147 = pneg %p48
        %p148 = pneg %p72
        %p149 = pneg %p69
        %p150 = pneg %p100
        %p151 = pneg %p97
        %s152 = sand.u32 %s87, 1
        %s153 = scalar_lea.sflag [#allocation3], %s152
        %s154 = sand.u32 %s87, 1
        %s155 = smul.addr %s154, 4
        %s156 = scalar_lea.vmem [#allocation2], %s155
        %p157 = scmp.lt.s32.totalorder %s20, 1
        %s158 = scalar_select %p157, %s20, 1
        %p159 = scmp.lt.s32.totalorder %s21, 0
        %s160 = scalar_select %p159, %s21, 0
        %s161 = sadd.s32 %s160, %s158
        %s162 = smul.addr %s161, 4
        %s163 = scalar_lea.vmem %s0, %s162
        %v164 = vld [vmem:[%s163] sm:$0xf]
        %vm165 = vcmask 125952
        %v166 = vsel %vm165, %v164, 0.0
        %v167 = vrot.slane %v166, 4
        %v168 = vadd.f32 %v166, %v167
        %v169 = vrot.slane %v168, 2
        %v170 = vadd.f32 %v168, %v169
        %v171 = vrot.slane %v170, 1
        %v172 = vadd.f32 %v170, %v171
        %v173 = vmul.f32 %v172, 0.25
        %v174 = vsub.f32 %v164, %v173
        %v175 = vmul.f32 %v174, %v174
        %v176 = vsel %vm165, %v175, 0.0
        %v177 = vrot.slane %v176, 4
        %v178 = vadd.f32 %v176, %v177
        %v179 = vrot.slane %v178, 2
        %v180 = vadd.f32 %v178, %v179
        %v181 = vrot.slane %v180, 1
        %v182 = vadd.f32 %v180, %v181
        %v183 = vmul.f32 %v182, 0.25
        %v184 = vadd.f32 %v183, 1e-05
        %v185 = vrsqrt.pop %v184
        %v186 = vmul.f32 %v174, %v185
        %v187 = vld [vmem:[%s1] sm:$0xf]
        %s188 = scalar_lea.vmem %s1, 4
        %v189 = vld [vmem:[%s188] sm:$0xf]
        %191 = vset.pattern.permute.xlu0 0
        %192 = vperm.xlu0 %191, %v187
        %v193 = vpop.permute.xlu0 %192
        %v195 = vmul.f32 %v186, %v193
        %197 = vset.pattern.permute.xlu0 0
        %198 = vperm.xlu0 %197, %v189
        %v199 = vpop.permute.xlu0 %198
        %v201 = vadd.f32 %v195, %v199
        %202 = vst.msk [vmem:[%s156] sm:$0xf] %vm165, %v201
        %s203 = sand.u32 %s87, 1
        %s204 = scalar_lea.sflag [#allocation3], %s203
        %s205 = sand.u32 %s87, 1
        %s206 = smul.addr %s205, 4
        %s207 = scalar_lea.vmem [#allocation2], %s206
        // Predicated region
        $region29: #{tpu_custom_call.1} parent=27 // pred_check
          %p208 = pneg %p97
        $region30: #{tpu_custom_call.1} parent=27 // pred_check_branch
          %210 = sbr.rel (%p208) target = $region32
        $region31: #{tpu_custom_call.1} parent=27 // pred_region
          %s212 = ssub.s32 64, 64
          %213 = vsyncadd %s204, %s212
          %s214 = sadd.s32 %s21, %s20
          %s215 = smul.addr %s214, 64
          %s216 = scalar_lea.hbm %s2, %s215
          %s218 = sshll.u32 %s207, 4
          %s219 = int_to_ptr.vmem [resolvable:$true] %s218
          %221 = dma.vmem_to_hbm [thread:$0]  %s219, 64, %s216, %s204
        $region32: #{tpu_custom_call.1} parent=27 // pred_fallthru
          _
      $region28: #{tpu_custom_call.1} parent=5 // pred_fallthru
        _
      %p222 = scmp.le.s32.totalorder 2, %s11
      // Predicated region
      $region33: #{tpu_custom_call.1} parent=5 // pred_check
        %p223 = pneg %p222
      $region34: #{tpu_custom_call.1} parent=5 // pred_check_branch
        %225 = sbr.rel (%p223) target = $region36
      $region35: #{tpu_custom_call.1} parent=5 // pred_region
        %s226 = ssub.s32 %s11, 2
        // Predicated region
        $region37: #{tpu_custom_call.1} parent=35 // pred_check
          %p227 = pneg %p103
        $region38: #{tpu_custom_call.1} parent=35 // pred_check_branch
          %229 = sbr.rel (%p227) target = $region40
        $region39: #{tpu_custom_call.1} parent=35 // pred_region
          %s230 = sand.u32 %s88, 1
          %s231 = scalar_lea.sflag [#allocation3], %s230
          %s232 = sand.u32 %s88, 1
          %s233 = smul.addr %s232, 4
          %s234 = scalar_lea.vmem [#allocation2], %s233
          %235 = dma.done %s231, 64
        $region40: #{tpu_custom_call.1} parent=35 // pred_fallthru
          _
      $region36: #{tpu_custom_call.1} parent=5 // pred_fallthru
        _
    $region6: #{tpu_custom_call.1} parent=1 // loop_footer
      %s15 = sadd.s32 1, %s11
    $region7: #{tpu_custom_call.1} parent=1 // loop_footer_branch
      %10 = sbr.rel target = $region3
    $region8: #{tpu_custom_call.1} parent=1 // loop_exit
      _
    %236 = vsyncpa [#allocation3], 1
    %s237 = scalar_lea.sflag [#allocation3], 1
    %238 = vsyncpa %s237, 1

</llo_original>
